<compile_context>
chip_gen: v5e
topology: v5e:2x2
jax: 0.10.0
libtpu: 0.0.40
codegen_flags: <defaults>
</compile_context>

<pallas_src>
import jax
import jax.numpy as jnp
from jax import lax
from jax.experimental import pallas as pl
from jax.experimental.pallas import tpu as pltpu


def _round_up(x, m):
    return ((x + m - 1) // m) * m


def _make_focal_kernel(n_total, tn, mask_cols, assume_binary_labels, compute_dtype):
    """Builds the per-tile kernel. Static config baked in at trace time."""

    def kernel(pred_ref, gt_ref, out_ref):
        j = pl.program_id(1)  # column-block index (reduction axis, innermost)

        @pl.when(j == 0)
        def _init():
            out_ref[...] = jnp.zeros_like(out_ref)

        pred = pred_ref[...].astype(compute_dtype)
        gt = gt_ref[...]
        if gt.dtype.itemsize < 4 and not jnp.issubdtype(gt.dtype, jnp.floating):
            # int8/bool labels: widen on the integer side only (no float convert /
            # float temporary of gt) so the compares lower robustly on all gens.
            gt = gt.astype(jnp.int32)

        is_pos = gt == 1
        p = jnp.where(is_pos, pred, 1.0 - pred)
        # pos: log(pred+eps)*(1-pred)^2 ; neg: log(1-pred+eps)*pred^2  — unified.
        term = jnp.log(p + 1e-6) * jnp.square(1.0 - p)

        if not assume_binary_labels:
            # Full PyTorch semantics: gt > 1 excluded from both pos and neg loss.
            term = jnp.where(gt > 1, jnp.zeros_like(term), term)

        if mask_cols:
            # Ragged last column block: zero padded columns so they cannot
            # contaminate the row sums accumulated across column blocks.
            col = lax.broadcasted_iota(jnp.int32, term.shape, 1) + j * tn
            term = jnp.where(col < n_total, term, jnp.zeros_like(term))

        # Row sums always accumulate in f32 (even for bf16 elementwise math).
        # num_pos == 0 rows: pos contribution is exactly 0, so this matches the
        # PyTorch branch for free.
        out_ref[...] += -jnp.sum(term.astype(jnp.float32), axis=1, keepdims=True)

    return kernel


def focal_tag_loss(pred, gt, *, assume_binary_labels=True, low_precision_math=False,
                   block_rows=None, block_cols=None):
    """FocalTagLoss.forward as a Pallas TPU kernel.

    pred: (B, N) float probabilities (f32 or bf16).
    gt:   (B, N) multi-hot 0/1 labels, any numeric dtype (f32 / bf16 / int8 / bool).

    Fast path for the HBM-bound regime (v5e/v6e): pass pred as bf16 and gt as int8.
    low_precision_math=True keeps the elementwise chain in pred's narrow float dtype
    (useful on v6e/v7x once narrow inputs make the kernel compute-bound); the row
    reduction always accumulates in f32.
    """
    assert pred.ndim == 2 and pred.shape == gt.shape
    B, N = pred.shape
    bytes_per_elem = pred.dtype.itemsize + gt.dtype.itemsize

    if (low_precision_math and jnp.issubdtype(pred.dtype, jnp.floating)
            and pred.dtype.itemsize < 4):
        compute_dtype = pred.dtype
    else:
        compute_dtype = jnp.float32

    # ---- per-generation VMEM budget -------------------------------------
    try:
        vmem_cap = int(pltpu.get_tpu_info().vmem_capacity_bytes)
    except Exception:  # interpret mode / exotic backends
        vmem_cap = 64 << 20
    # Target total double-buffered input bytes per pipeline step.
    dbuf_target = (20 << 20) if vmem_cap >= (96 << 20) else (10 << 20)
    step_input_budget = dbuf_target // 2  # single-buffered tile bytes (both inputs)

    MIN_ROWS = 8

    # ---- column (lane) tile: multiple of 128, or the full N --------------
    max_tn = max(128, (step_input_budget // (MIN_ROWS * bytes_per_elem)) // 128 * 128)
    if block_cols is not None:
        tn = N if block_cols >= N else max(128, (block_cols // 128) * 128)
    else:
        tn = N if N <= max_tn else max_tn
    if tn >= N:
        tn = N
    mask_cols = (tn < N) and (N % tn != 0)

    # ---- row (sublane) tile: multiple of 8, or the full B -----------------
    if block_rows is not None:
        tb = B if block_rows >= B else max(MIN_ROWS, (block_rows // 8) * 8)
    else:
        rows_by_budget = max(
            MIN_ROWS, (step_input_budget // max(tn * bytes_per_elem, 1)) // 8 * 8)
        if B <= MIN_ROWS:
            tb = B
        else:
            # Aim for >= 2 (even) and up to 8 row blocks so the "parallel" axis can
            # feed both v7x TensorCores and the pipeline overlaps DMA with compute.
            target_blocks = max(1, min(8, B // MIN_ROWS))
            if target_blocks >= 2:
                target_blocks -= target_blocks % 2
            rows_for_blocks = _round_up(pl.cdiv(B, target_blocks), 8)
            tb = max(MIN_ROWS, min(rows_by_budget, rows_for_blocks))
            tb = min(tb, (B // 8) * 8)
    if tb >= B:
        tb = B

    grid = (pl.cdiv(B, tb), pl.cdiv(N, tn))

    # ---- VMEM limit: 2 inputs x 2 pipeline buffers + headroom, clamped to this
    # generation's physical capacity (64 MiB on v7x vs 128 MiB on v5e/v6e). -----
    dbuf_bytes = 2 * tb * tn * bytes_per_elem + 2 * tb * 4
    vmem_limit = int(min(max(32 << 20, int(2.5 * dbuf_bytes)),
                         max(32 << 20, vmem_cap - (16 << 20))))

    kernel = _make_focal_kernel(N, tn, mask_cols, assume_binary_labels, compute_dtype)

    per_row = pl.pallas_call(
        kernel,
        out_shape=jax.ShapeDtypeStruct((B, 1), jnp.float32),
        grid_spec=pltpu.PrefetchScalarGridSpec(
            num_scalar_prefetch=0,
            grid=grid,
            in_specs=[
                pl.BlockSpec((tb, tn), lambda i, j: (i, j)),
                pl.BlockSpec((tb, tn), lambda i, j: (i, j)),
            ],
            # Output block indexed only by i -> resident across the column axis,
            # acting as the f32 row-sum accumulator.
            out_specs=pl.BlockSpec((tb, 1), lambda i, j: (i, 0)),
        ),
        compiler_params=pltpu.CompilerParams(
            dimension_semantics=("parallel", "arbitrary"),
            vmem_limit_bytes=vmem_limit,
        ),
    )(pred, gt)

    # Final mean over rows (tiny, done in plain JAX).
    return jnp.mean(per_row)


def _focal_tag_loss_ref(pred, gt):
    """Pure-JAX reference mirroring the PyTorch module (f32, keeps both logs and
    the num_pos branch for fidelity)."""
    eps = 1e-6
    pred = pred.astype(jnp.float32)
    gt = gt.astype(jnp.float32)
    pos_inds = (gt == 1.0).astype(jnp.float32)
    neg_inds = (gt < 1.0).astype(jnp.float32)
    pos_loss = jnp.log(pred + eps) * jnp.square(1.0 - pred) * pos_inds
    neg_loss = jnp.log(1.0 - pred + eps) * jnp.square(pred) * neg_inds
    num_pos = pos_inds.sum(axis=1)
    pos_s = pos_loss.sum(axis=1)
    neg_s = neg_loss.sum(axis=1)
    per_row = jnp.where(num_pos == 0.0, -neg_s, -(pos_s + neg_s))
    return per_row.mean()


if __name__ == "__main__":
    key = jax.random.PRNGKey(0)
    k1, k2, k3, k4 = jax.random.split(key, 4)

    # ---- case 1: f32 pred / f32 gt, explicit tiles -> 2-D grid (4 x 2) ----
    B, N = 32, 256
    pred = jax.nn.sigmoid(jax.random.normal(k1, (B, N), dtype=jnp.float32))
    gt = (jax.random.uniform(k2, (B, N)) > 0.8).astype(jnp.float32)
    gt = gt.at[-1].set(0.0)  # exercise the num_pos == 0 row
    ref = _focal_tag_loss_ref(pred, gt)

    out = focal_tag_loss(pred, gt, block_rows=8, block_cols=128)
    jax.block_until_ready(out)
    assert jnp.allclose(out, ref, rtol=1e-5, atol=1e-5), (out, ref)

    # same data, full PyTorch gt>1 exclusion path compiled in
    out = focal_tag_loss(pred, gt, assume_binary_labels=False,
                         block_rows=8, block_cols=128)
    jax.block_until_ready(out)
    assert jnp.allclose(out, ref, rtol=1e-5, atol=1e-5), (out, ref)

    # ---- case 2: int8 gt, auto tile selection (grid (4, 1)) ---------------
    gt_i8 = gt.astype(jnp.int8)
    out = focal_tag_loss(pred, gt_i8)
    jax.block_until_ready(out)
    assert jnp.allclose(out, ref, rtol=1e-5, atol=1e-5), (out, ref)

    # ---- case 3: ragged rows AND columns (masked tail blocks) -------------
    B2, N2 = 28, 384
    pred2 = jax.nn.sigmoid(jax.random.normal(k3, (B2, N2), dtype=jnp.float32))
    gt2 = (jax.random.uniform(k4, (B2, N2)) > 0.85).astype(jnp.float32)
    ref2 = _focal_tag_loss_ref(pred2, gt2)
    out2 = focal_tag_loss(pred2, gt2, block_rows=16, block_cols=256)
    jax.block_until_ready(out2)
    assert jnp.allclose(out2, ref2, rtol=1e-5, atol=1e-5), (out2, ref2)

    # ---- case 4: narrow-dtype HBM fast path (bf16 pred, int8 gt) ----------
    pred_bf16 = pred.astype(jnp.bfloat16)
    ref_bf = _focal_tag_loss_ref(pred_bf16, gt)       # same rounded inputs
    out_bf = focal_tag_loss(pred_bf16, gt_i8)         # in-kernel f32 math
    jax.block_until_ready(out_bf)
    assert jnp.allclose(out_bf, ref_bf, rtol=1e-5, atol=1e-5), (out_bf, ref_bf)

    # bf16 elementwise math (v6e/v7x lever); row sums still accumulate in f32.
    out_bf_lp = focal_tag_loss(pred_bf16, gt_i8, low_precision_math=True,
                               block_rows=8, block_cols=128)
    jax.block_until_ready(out_bf_lp)
    assert jnp.allclose(out_bf_lp, ref_bf, rtol=3e-2, atol=0.2), (out_bf_lp, ref_bf)

    print("KERNEL_OK")
</pallas_src>

<mosaic_0001>
module attributes {stable_mosaic.version = 11 : i64} {
  func.func @kernel(%arg0: i32, %arg1: i32, %arg2: memref<8x128xf32, #tpu.memory_space<vmem>>, %arg3: memref<8x128xf32, #tpu.memory_space<vmem>>, %arg4: memref<8x1xf32, #tpu.memory_space<vmem>>) attributes {dimension_semantics = [#tpu.dimension_semantics<parallel>, #tpu.dimension_semantics<arbitrary>], iteration_bounds = array<i64: 4, 2>, scalar_prefetch = 0 : i64, scratch_operands = 0 : i64, tpu.core_type = #tpu.core_type<tc>, window_params = [{transform_indices = @transform_0, window_bounds = array<i64: 8, 128>}, {transform_indices = @transform_1, window_bounds = array<i64: 8, 128>}, {transform_indices = @transform_2, window_bounds = array<i64: 8, 1>}]} {
    %c0_i32 = arith.constant 0 : i32
    %0 = arith.cmpi eq, %arg1, %c0_i32 : i32
    %1 = arith.extui %0 : i1 to i32
    %c0_i32_0 = arith.constant 0 : i32
    %2 = arith.cmpi ne, %1, %c0_i32_0 : i32
    scf.if %2 {
      %cst_13 = arith.constant 0.000000e+00 : f32
      %24 = vector.broadcast %cst_13 : f32 to vector<8x1xf32>
      %c0_14 = arith.constant 0 : index
      %c0_15 = arith.constant 0 : index
      %25 = vector.load %arg4[%c0_14, %c0_15] : memref<8x1xf32, #tpu.memory_space<vmem>>, vector<8x1xf32>
      tpu.vector_store %arg4[%c0_14, %c0_15], %24 {strides = array<i32>} : memref<8x1xf32, #tpu.memory_space<vmem>>, vector<8x1xf32>,
    } else {
    }
    %c0 = arith.constant 0 : index
    %c0_1 = arith.constant 0 : index
    %3 = vector.load %arg2[%c0, %c0_1] : memref<8x128xf32, #tpu.memory_space<vmem>>, vector<8x128xf32>
    %c0_2 = arith.constant 0 : index
    %c0_3 = arith.constant 0 : index
    %4 = vector.load %arg3[%c0_2, %c0_3] : memref<8x128xf32, #tpu.memory_space<vmem>>, vector<8x128xf32>
    %cst = arith.constant 1.000000e+00 : f32
    %5 = vector.broadcast %cst : f32 to vector<8x128xf32>
    %6 = arith.cmpf oeq, %4, %5 : vector<8x128xf32>
    %cst_4 = arith.constant 1.000000e+00 : f32
    %7 = vector.broadcast %cst_4 : f32 to vector<8x128xf32>
    %8 = arith.subf %7, %3 : vector<8x128xf32>
    %9 = arith.select %6, %3, %8 : vector<8x128xi1>, vector<8x128xf32>
    %cst_5 = arith.constant 9.99999997E-7 : f32
    %10 = vector.broadcast %cst_5 : f32 to vector<8x128xf32>
    %11 = arith.addf %9, %10 : vector<8x128xf32>
    %12 = math.log %11 : vector<8x128xf32>
    %cst_6 = arith.constant 1.000000e+00 : f32
    %13 = vector.broadcast %cst_6 : f32 to vector<8x128xf32>
    %14 = arith.subf %13, %9 : vector<8x128xf32>
    %15 = arith.mulf %14, %14 : vector<8x128xf32>
    %16 = arith.mulf %12, %15 : vector<8x128xf32>
    %c0_7 = arith.constant 0 : index
    %c0_8 = arith.constant 0 : index
    %17 = vector.load %arg4[%c0_7, %c0_8] : memref<8x1xf32, #tpu.memory_space<vmem>>, vector<8x1xf32>
    %cst_9 = arith.constant dense<0.000000e+00> : vector<8xf32>
    %18 = vector.multi_reduction <add>, %16, %cst_9 [1] : vector<8x128xf32> to vector<8xf32>
    %19 = vector.shape_cast %18 : vector<8xf32> to vector<8x1xf32>
    %cst_10 = arith.constant 0.000000e+00 : f32
    %20 = vector.broadcast %cst_10 : f32 to vector<8x1xf32>
    %21 = arith.subf %20, %19 : vector<8x1xf32>
    %22 = arith.addf %17, %21 : vector<8x1xf32>
    %c0_11 = arith.constant 0 : index
    %c0_12 = arith.constant 0 : index
    %23 = vector.load %arg4[%c0_11, %c0_12] : memref<8x1xf32, #tpu.memory_space<vmem>>, vector<8x1xf32>
    tpu.vector_store %arg4[%c0_11, %c0_12], %22 {strides = array<i32>} : memref<8x1xf32, #tpu.memory_space<vmem>>, vector<8x1xf32>,
    return
  }
  func.func @transform_0(%arg0: i32, %arg1: i32) -> (i32, i32) {
    %c0_i32 = arith.constant 0 : i32
    return %arg0, %arg1 : i32, i32
  }
  func.func @transform_1(%arg0: i32, %arg1: i32) -> (i32, i32) {
    %c0_i32 = arith.constant 0 : i32
    return %arg0, %arg1 : i32, i32
  }
  func.func @transform_2(%arg0: i32, %arg1: i32) -> (i32, i32) {
    %c0_i32 = arith.constant 0 : i32
    %c0_i32_0 = arith.constant 0 : i32
    return %arg0, %c0_i32 : i32, i32
  }
}

</mosaic_0001>

<llo_original>
// kernel: tpu_custom_call.1
$region0: #{tpu_custom_call.1}
  #allocation0 [shape = 'u32[]', space=smem, size = 0x4, offset = 0x4, fixed_abs, tag = 'smem constant byte address 0x4 - core index']
  #allocation1 [shape = 'u32[72,128]{1,0:T(1,128)}', space=vmem, size = 0x9000, scoped, tag = 'internal scratch']
  %s0 = inlined_call_operand.hbm [shape: f32[32,256], index: 0, kind: input, shape index: {}]
  %s1 = inlined_call_operand.hbm [shape: f32[32,256], index: 1, kind: input, shape index: {}]
  %s2 = inlined_call_operand.vmem [shape: f32[32,1], index: 2, kind: output, shape index: {}]
  %s3 = sld [smem:[#allocation0]]
  $region53: #{tpu_custom_call.1} parent=0
    _
  %s5 = ssub.s32 1, %s3
  %s6 = scalar_select 0, %s5, %s3
  $region1: #{tpu_custom_call.1} parent=0
    #allocation2 [shape = 'u8[8192]{0}', space=vmem, size = 0x2000, scoped, tag = 'input window, operand 0']
    #allocation3 [shape = 's32[2]{0}', space=sflag, size = 0x8, scoped, tag = 'scoped memory for tpu_custom_call.1']
    #allocation4 [shape = 'u8[8192]{0}', space=vmem, size = 0x2000, scoped, tag = 'input window, operand 1']
    #allocation5 [shape = 's32[2]{0}', space=sflag, size = 0x8, scoped, tag = 'scoped memory for tpu_custom_call.1']
    %7 = vsyncpa [#allocation3], 0
    %s8 = scalar_lea.sflag [#allocation3], 1
    %9 = vsyncpa %s8, 0
    %10 = vsyncpa [#allocation5], 0
    %s11 = scalar_lea.sflag [#allocation5], 1
    %12 = vsyncpa %s11, 0
    loop: start=0, step=1, limit=10
    $region2: #{tpu_custom_call.1} parent=1 // loop_pre_header
      _
    $region3: #{tpu_custom_call.1} parent=1 // loop_header
      %s14 = sphi 0, %s18
      %p15 = scmp.ge.s32.totalorder %s14, 10
      %s21 = sphi 0, %s33
      %s22 = sphi 0, %s29
      %s23 = sphi 0, %s21
      %s24 = sphi 0, %s22
      %s25 = sphi 0, %s23
      %s26 = sphi 0, %s24
      %s38 = sphi 0, %s40
      %s41 = sphi 0, %s38
      %s42 = sphi 0, %s41
      %s58 = sphi 0, %s42
      %s66 = sphi 0, %s68
      %s69 = sphi 0, %s66
      %s70 = sphi 0, %s69
      %s86 = sphi 0, %s70
      %s92 = sphi 0, %s94
      %s95 = sphi 0, %s92
      %s96 = sphi 0, %s95
      %s112 = sphi 0, %s96
    $region4: #{tpu_custom_call.1} parent=1 // loop_header_branch
      %17 = sbr.rel (%p15) target = $region8
    $region5: #{tpu_custom_call.1} parent=1 // loop_body
      %s19 = ssub.s32 %s14, 1
      %s20 = ssub.s32 %s14, 2
      %s27 = sadd.s32 1, %s22
      %p28 = scmp.ge.s32.totalorder %s27, 2
      %s29 = scalar_select %p28, 0, %s27
      %s30 = sadd.s32 1, %s21
      %s31 = scalar_select %p28, %s30, %s21
      %p32 = scmp.ge.s32.totalorder %s31, 4
      %s33 = scalar_select %p32, 0, %s31
      %s34 = ssub.s32 %s21, %s33
      %s35 = ssub.s32 %s22, %s29
      %s36 = sor.u32 %s34, %s35
      %p37 = scmp.eq.s32.totalorder %s36, 0
      %s39 = sadd.s32 %s38, 1
      %s40 = scalar_select %p37, %s38, %s39
      %p43 = pneg %p37
      %p44 = scmp.eq.s32.totalorder %s14, 7
      %p45 = por %p43, %p44
      %p46 = scmp.ne.s32.totalorder %s38, %s41
      %p47 = scmp.eq.s32.totalorder %s14, 0
      %p48 = por %p46, %p47
      %p49 = scmp.ne.s32.totalorder %s38, %s41
      %p50 = scmp.eq.s32.totalorder %s19, 7
      %p51 = por %p49, %p50
      %p52 = scmp.ne.s32.totalorder %s41, %s42
      %p53 = scmp.eq.s32.totalorder %s19, 0
      %p54 = por %p52, %p53
      %p55 = scmp.ne.s32.totalorder %s41, %s42
      %p56 = scmp.eq.s32.totalorder %s20, 7
      %p57 = por %p55, %p56
      %p59 = scmp.ne.s32.totalorder %s42, %s58
      %p60 = scmp.eq.s32.totalorder %s20, 0
      %p61 = por %p59, %p60
      %s62 = ssub.s32 %s21, %s33
      %s63 = ssub.s32 %s22, %s29
      %s64 = sor.u32 %s62, %s63
      %p65 = scmp.eq.s32.totalorder %s64, 0
      %s67 = sadd.s32 %s66, 1
      %s68 = scalar_select %p65, %s66, %s67
      %p71 = pneg %p65
      %p72 = scmp.eq.s32.totalorder %s14, 7
      %p73 = por %p71, %p72
      %p74 = scmp.ne.s32.totalorder %s66, %s69
      %p75 = scmp.eq.s32.totalorder %s14, 0
      %p76 = por %p74, %p75
      %p77 = scmp.ne.s32.totalorder %s66, %s69
      %p78 = scmp.eq.s32.totalorder %s19, 7
      %p79 = por %p77, %p78
      %p80 = scmp.ne.s32.totalorder %s69, %s70
      %p81 = scmp.eq.s32.totalorder %s19, 0
      %p82 = por %p80, %p81
      %p83 = scmp.ne.s32.totalorder %s69, %s70
      %p84 = scmp.eq.s32.totalorder %s20, 7
      %p85 = por %p83, %p84
      %p87 = scmp.ne.s32.totalorder %s70, %s86
      %p88 = scmp.eq.s32.totalorder %s20, 0
      %p89 = por %p87, %p88
      %s90 = ssub.s32 %s21, %s33
      %p91 = scmp.eq.s32.totalorder %s90, 0
      %s93 = sadd.s32 %s92, 1
      %s94 = scalar_select %p91, %s92, %s93
      %p97 = pneg %p91
      %p98 = scmp.eq.s32.totalorder %s14, 7
      %p99 = por %p97, %p98
      %p100 = scmp.ne.s32.totalorder %s92, %s95
      %p101 = scmp.eq.s32.totalorder %s14, 0
      %p102 = por %p100, %p101
      %p103 = scmp.ne.s32.totalorder %s92, %s95
      %p104 = scmp.eq.s32.totalorder %s19, 7
      %p105 = por %p103, %p104
      %p106 = scmp.ne.s32.totalorder %s95, %s96
      %p107 = scmp.eq.s32.totalorder %s19, 0
      %p108 = por %p106, %p107
      %p109 = scmp.ne.s32.totalorder %s95, %s96
      %p110 = scmp.eq.s32.totalorder %s20, 7
      %p111 = por %p109, %p110
      %p113 = scmp.ne.s32.totalorder %s96, %s112
      %p114 = scmp.eq.s32.totalorder %s20, 0
      %p115 = por %p113, %p114
      %p116 = scmp.le.s32.totalorder 1, %s14
      %p117 = scmp.lt.s32.totalorder %s14, 9
      %p118 = pnand %p116, %p117
      %p119 = pneg %p118
      // Predicated region
      $region9: #{tpu_custom_call.1} parent=5 // pred_check
        _
      $region10: #{tpu_custom_call.1} parent=5 // pred_check_branch
        %121 = sbr.rel (%p118) target = $region12
      $region11: #{tpu_custom_call.1} parent=5 // pred_region
        %s122 = ssub.s32 %s14, 1
      $region12: #{tpu_custom_call.1} parent=5 // pred_fallthru
        _
      %p123 = scmp.lt.s32.totalorder %s14, 8
      // Predicated region
      $region13: #{tpu_custom_call.1} parent=5 // pred_check
        %p124 = pneg %p123
      $region14: #{tpu_custom_call.1} parent=5 // pred_check_branch
        %126 = sbr.rel (%p124) target = $region16
      $region15: #{tpu_custom_call.1} parent=5 // pred_region
        // Predicated region
        $region17: #{tpu_custom_call.1} parent=15 // pred_check
          %p127 = pneg %p48
        $region18: #{tpu_custom_call.1} parent=15 // pred_check_branch
          %129 = sbr.rel (%p127) target = $region20
        $region19: #{tpu_custom_call.1} parent=15 // pred_region
          %s130 = sand.u32 %s38, 1
          %s131 = scalar_lea.sflag [#allocation3], %s130
          %s132 = sand.u32 %s38, 1
          %s133 = smul.addr %s132, 8
          %s134 = scalar_lea.vmem [#allocation2], %s133
          %136 = vsyncadd %s131, 0
          %s137 = smul.addr %s21, 2
          %s138 = sadd.s32 %s22, %s137
          %s139 = smul.addr %s138, 8
          %s140 = scalar_lea.hbm %s0, %s139
          %s142 = sshll.u32 %s140, 4
          %s143 = int_to_ptr.hbm [resolvable:$true] %s142
          %s144 = sshll.u32 %s134, 4
          %s145 = int_to_ptr.vmem [resolvable:$true] %s144
          %147 = dma.hbm_to_vmem [thread:$0]  %s143, 128, %s145, %s131
        $region20: #{tpu_custom_call.1} parent=15 // pred_fallthru
          _
        // Predicated region
        $region21: #{tpu_custom_call.1} parent=15 // pred_check
          %p148 = pneg %p76
        $region22: #{tpu_custom_call.1} parent=15 // pred_check_branch
          %150 = sbr.rel (%p148) target = $region24
        $region23: #{tpu_custom_call.1} parent=15 // pred_region
          %s151 = sand.u32 %s66, 1
          %s152 = scalar_lea.sflag [#allocation5], %s151
          %s153 = sand.u32 %s66, 1
          %s154 = smul.addr %s153, 8
          %s155 = scalar_lea.vmem [#allocation4], %s154
          %157 = vsyncadd %s152, 0
          %s158 = smul.addr %s21, 2
          %s159 = sadd.s32 %s22, %s158
          %s160 = smul.addr %s159, 8
          %s161 = scalar_lea.hbm %s1, %s160
          %s163 = sshll.u32 %s161, 4
          %s164 = int_to_ptr.hbm [resolvable:$true] %s163
          %s165 = sshll.u32 %s155, 4
          %s166 = int_to_ptr.vmem [resolvable:$true] %s165
          %168 = dma.hbm_to_vmem [thread:$0]  %s164, 128, %s166, %s152
        $region24: #{tpu_custom_call.1} parent=15 // pred_fallthru
          _
      $region16: #{tpu_custom_call.1} parent=5 // pred_fallthru
        _
      %p169 = scmp.le.s32.totalorder 1, %s14
      %p170 = scmp.lt.s32.totalorder %s14, 9
      %p171 = pnand %p169, %p170
      %p172 = pneg %p171
      // Predicated region
      $region25: #{tpu_custom_call.1} parent=5 // pred_check
        _
      $region26: #{tpu_custom_call.1} parent=5 // pred_check_branch
        %174 = sbr.rel (%p171) target = $region28
      $region27: #{tpu_custom_call.1} parent=5 // pred_region
        %s175 = ssub.s32 %s14, 1
        %s176 = sand.u32 %s41, 1
        %s177 = scalar_lea.sflag [#allocation3], %s176
        %s178 = sand.u32 %s41, 1
        %s179 = smul.addr %s178, 8
        %s180 = scalar_lea.vmem [#allocation2], %s179
        // Predicated region
        $region29: #{tpu_custom_call.1} parent=27 // pred_check
          %p181 = pneg %p54
        $region30: #{tpu_custom_call.1} parent=27 // pred_check_branch
          %183 = sbr.rel (%p181) target = $region32
        $region31: #{tpu_custom_call.1} parent=27 // pred_region
          %185 = dma.done %s177, 128
        $region32: #{tpu_custom_call.1} parent=27 // pred_fallthru
          _
        %s186 = sand.u32 %s69, 1
        %s187 = scalar_lea.sflag [#allocation5], %s186
        %s188 = sand.u32 %s69, 1
        %s189 = smul.addr %s188, 8
        %s190 = scalar_lea.vmem [#allocation4], %s189
        // Predicated region
        $region33: #{tpu_custom_call.1} parent=27 // pred_check
          %p191 = pneg %p82
        $region34: #{tpu_custom_call.1} parent=27 // pred_check_branch
          %193 = sbr.rel (%p191) target = $region36
        $region35: #{tpu_custom_call.1} parent=27 // pred_region
          %195 = dma.done %s187, 128
        $region36: #{tpu_custom_call.1} parent=27 // pred_fallthru
          _
        %s196 = sand.u32 %s41, 1
        %s197 = scalar_lea.sflag [#allocation3], %s196
        %s198 = sand.u32 %s41, 1
        %s199 = smul.addr %s198, 8
        %s200 = scalar_lea.vmem [#allocation2], %s199
        %p201 = pneg %p54
        %p202 = pneg %p51
        %s203 = sand.u32 %s69, 1
        %s204 = scalar_lea.sflag [#allocation5], %s203
        %s205 = sand.u32 %s69, 1
        %s206 = smul.addr %s205, 8
        %s207 = scalar_lea.vmem [#allocation4], %s206
        %p208 = pneg %p82
        %p209 = pneg %p79
        %p210 = pneg %p108
        %p211 = pneg %p105
        %p212 = scmp.lt.s32.totalorder %s23, 3
        %s213 = scalar_select %p212, %s23, 3
        %s214 = smul.addr %s213, 8
        %s215 = scalar_lea.vmem %s2, %s214
        %p216 = scmp.lt.s32.totalorder %s23, 3
        %s217 = scalar_select %p216, %s23, 3
        %s218 = smul.addr %s217, 8
        %s219 = scalar_lea.vmem %s2, %s218
        %p220 = scmp.eq.s32.totalorder %s24, 0
        // Predicated region
        $region37: #{tpu_custom_call.1} parent=27 // pred_check
          %p221 = pneg %p220
        $region38: #{tpu_custom_call.1} parent=27 // pred_check_branch
          %223 = sbr.rel (%p221) target = $region40
        $region39: #{tpu_custom_call.1} parent=27 // pred_region
          %vm224 = vcmask 7168
          %225 = vst.msk [vmem:[%s219] sm:$0xff] %vm224, 0.0
        $region40: #{tpu_custom_call.1} parent=27 // pred_fallthru
          _
        %v226 = vld [vmem:[%s180] sm:$0xff]
        %v227 = vld [vmem:[%s190] sm:$0xff]
        %vm228 = vcmp.eq.f32.partialorder %v227, 1.0
        %v229 = vsub.f32 1.0, %v226
        %v230 = vsel %vm228, %v226, %v229
        %v231 = vadd.f32 %v230, 1e-06
        %v232 = vlog2.pop %v231
        %v233 = vmul.f32 %v232, 0.6931472
        %v234 = vsub.f32 1.0, %v230
        %v235 = vmul.f32 %v234, %v234
        %v236 = vmul.f32 %v233, %v235
        %v237 = vld [vmem:[%s219] sm:$0xff]
        %238 = vadd.xlane.f32.xlu0 %v236
        %v239 = vpop.xlane.xlu0 %238
        %v240 = vsub.f32 0.0, %v239
        %v241 = vadd.f32 %v237, %v240
        %vm242 = vcmask 7168
        %243 = vst.msk [vmem:[%s219] sm:$0xff] %vm242, %v241
        %p244 = scmp.lt.s32.totalorder %s23, 3
        %s245 = scalar_select %p244, %s23, 3
        %s246 = smul.addr %s245, 8
        %s247 = scalar_lea.vmem %s2, %s246
        // Predicated region
        $region41: #{tpu_custom_call.1} parent=27 // pred_check
          %p248 = pneg %p105
        $region42: #{tpu_custom_call.1} parent=27 // pred_check_branch
          %250 = sbr.rel (%p248) target = $region44
        $region43: #{tpu_custom_call.1} parent=27 // pred_region
          _
        $region44: #{tpu_custom_call.1} parent=27 // pred_fallthru
          _
      $region28: #{tpu_custom_call.1} parent=5 // pred_fallthru
        _
      %p251 = scmp.le.s32.totalorder 2, %s14
      // Predicated region
      $region45: #{tpu_custom_call.1} parent=5 // pred_check
        %p252 = pneg %p251
      $region46: #{tpu_custom_call.1} parent=5 // pred_check_branch
        %254 = sbr.rel (%p252) target = $region48
      $region47: #{tpu_custom_call.1} parent=5 // pred_region
        %s255 = ssub.s32 %s14, 2
        // Predicated region
        $region49: #{tpu_custom_call.1} parent=47 // pred_check
          %p256 = pneg %p111
        $region50: #{tpu_custom_call.1} parent=47 // pred_check_branch
          %258 = sbr.rel (%p256) target = $region52
        $region51: #{tpu_custom_call.1} parent=47 // pred_region
          %p259 = scmp.lt.s32.totalorder %s25, 3
          %s260 = scalar_select %p259, %s25, 3
          %s261 = smul.addr %s260, 8
          %s262 = scalar_lea.vmem %s2, %s261
        $region52: #{tpu_custom_call.1} parent=47 // pred_fallthru
          _
      $region48: #{tpu_custom_call.1} parent=5 // pred_fallthru
        _
    $region6: #{tpu_custom_call.1} parent=1 // loop_footer
      %s18 = sadd.s32 1, %s14
    $region7: #{tpu_custom_call.1} parent=1 // loop_footer_branch
      %13 = sbr.rel target = $region3
    $region8: #{tpu_custom_call.1} parent=1 // loop_exit
      _
    %263 = vsyncpa [#allocation3], 1
    %s264 = scalar_lea.sflag [#allocation3], 1
    %265 = vsyncpa %s264, 1
    %266 = vsyncpa [#allocation5], 1
    %s267 = scalar_lea.sflag [#allocation5], 1
    %268 = vsyncpa %s267, 1

</llo_original>
